<compile_context>
chip_gen: v7x
topology: tpu7x:2x2x1
jax: 0.10.0
libtpu: 0.0.40
codegen_flags: <defaults>
</compile_context>

<pallas_src>
import jax
import jax.numpy as jnp
from jax.experimental import pallas as pl
from jax.experimental.pallas import tpu as pltpu

IN_DIM = 11        # model input features
HID = 100          # logical hidden width
OUT_DIM = 2        # logical output classes

HID_PAD = 128      # hidden width padded to one full lane tile
OUT_SLAB = 8       # small slab for logits/softmax compute (padded cols inert)
NEG_PAD = -1e30    # bias for padded output columns -> exp() underflows to 0
TB_MAX = 1024      # max batch tile (rows per grid step)


def _round_up(n, m):
    return ((n + m - 1) // m) * m


def _choose_tiling(B, tb_max=TB_MAX):
    """Pick (TB, B_pad, n_steps): >=2 grid steps when B >= 16 (v7x megacore),
    TB a multiple of 8, padding waste bounded by ~8 rows per step."""
    min_steps = 2 if B >= 16 else 1
    n_steps = max(min_steps, pl.cdiv(B, tb_max))
    tb = max(8, _round_up(pl.cdiv(B, n_steps), 8))
    b_pad = n_steps * tb
    return tb, b_pad, n_steps


def mlp_softmax_kernel(x_ref, w1_ref, b1_ref, w2_ref, b2_ref, w3_ref, b3_ref, o_ref):
    # layer 1: Linear + ReLU  (x: [TB, 11], w1: [11, 128])
    h1 = jnp.dot(x_ref[...], w1_ref[...], preferred_element_type=jnp.float32) + b1_ref[...]
    h1 = jnp.maximum(h1, 0.0)
    # layer 2: Linear + ReLU  (w2: [128, 128]; padded lanes of h1 are exactly 0)
    h2 = jnp.dot(h1, w2_ref[...], preferred_element_type=jnp.float32) + b2_ref[...]
    h2 = jnp.maximum(h2, 0.0)
    # layer 3: Linear on an 8-wide slab; padded columns get bias -1e30
    logits = jnp.dot(h2, w3_ref[...], preferred_element_type=jnp.float32) + b3_ref[...]
    # softmax over the 8-wide slab == softmax over the 2 real classes
    # (torch.nn.Softmax() on 2-D input -> dim=1)
    m = jnp.max(logits, axis=-1, keepdims=True)
    e = jnp.exp(logits - m)                       # padded lanes -> exp(-1e30 - m) == 0
    denom = jnp.sum(e, axis=-1, keepdims=True)
    probs = e * pl.reciprocal(denom, approx=False)
    # narrow HBM writeback: store only the real class columns
    o_ref[...] = probs[:, :OUT_DIM].astype(o_ref.dtype)


def mlp_forward(x, padded_params, tb_max=TB_MAX):
    """x: [B, IN_DIM] f32. padded_params: output of pad_params(). Returns [B, OUT_DIM]."""
    w1, b1, w2, b2, w3, b3 = padded_params
    B = x.shape[0]

    TB, B_pad, n_steps = _choose_tiling(B, tb_max)
    if B_pad != B:
        x = jnp.pad(x, ((0, B_pad - B), (0, 0)))
    grid = (n_steps,)

    flops = 2 * B_pad * (IN_DIM * HID_PAD + HID_PAD * HID_PAD + HID_PAD * OUT_SLAB)
    transcendentals = B_pad * OUT_SLAB
    bytes_accessed = 4 * (
        B_pad * IN_DIM + B_pad * OUT_DIM
        + IN_DIM * HID_PAD + HID_PAD
        + HID_PAD * HID_PAD + HID_PAD
        + HID_PAD * OUT_SLAB + OUT_SLAB
    )

    out = pl.pallas_call(
        mlp_softmax_kernel,
        out_shape=jax.ShapeDtypeStruct((B_pad, OUT_DIM), jnp.float32),
        grid=grid,
        in_specs=[
            pl.BlockSpec((TB, IN_DIM), lambda i: (i, 0)),         # x: streamed per tile
            pl.BlockSpec((IN_DIM, HID_PAD), lambda i: (0, 0)),    # w1: resident
            pl.BlockSpec((1, HID_PAD), lambda i: (0, 0)),         # b1: resident
            pl.BlockSpec((HID_PAD, HID_PAD), lambda i: (0, 0)),   # w2: resident
            pl.BlockSpec((1, HID_PAD), lambda i: (0, 0)),         # b2: resident
            pl.BlockSpec((HID_PAD, OUT_SLAB), lambda i: (0, 0)),  # w3: resident
            pl.BlockSpec((1, OUT_SLAB), lambda i: (0, 0)),        # b3: resident
        ],
        out_specs=pl.BlockSpec((TB, OUT_DIM), lambda i: (i, 0)),  # narrow writeback
        compiler_params=pltpu.CompilerParams(
            dimension_semantics=("parallel",),
        ),
        cost_estimate=pl.CostEstimate(
            flops=flops,
            transcendentals=transcendentals,
            bytes_accessed=bytes_accessed,
        ),
    )(x, w1, b1, w2, b2, w3, b3)

    return out[:B]


def init_params(key):
    """Logical params mimicking torch.nn.Linear defaults (uniform +/- 1/sqrt(fan_in)).
    Weights stored as [in_features, out_features]; biases as [1, out_features]."""
    k1, k2, k3, k4, k5, k6 = jax.random.split(key, 6)

    def lin(kw, kb, fan_in, fan_out):
        bound = 1.0 / jnp.sqrt(float(fan_in))
        w = jax.random.uniform(kw, (fan_in, fan_out), jnp.float32, -bound, bound)
        b = jax.random.uniform(kb, (1, fan_out), jnp.float32, -bound, bound)
        return w, b

    w1, b1 = lin(k1, k2, IN_DIM, HID)
    w2, b2 = lin(k3, k4, HID, HID)
    w3, b3 = lin(k5, k6, HID, OUT_DIM)
    return (w1, b1, w2, b2, w3, b3)


def pad_params(params):
    """Zero-pad hidden dim to 128 and build the 8-wide output slab.
    Padded hidden biases/weights are 0 (ReLU keeps padding at exactly 0);
    padded output columns get weight 0 and bias -1e30 (softmax weight 0)."""
    w1, b1, w2, b2, w3, b3 = params
    w1p = jnp.zeros((IN_DIM, HID_PAD), jnp.float32).at[:, :HID].set(w1)
    b1p = jnp.zeros((1, HID_PAD), jnp.float32).at[:, :HID].set(b1)
    w2p = jnp.zeros((HID_PAD, HID_PAD), jnp.float32).at[:HID, :HID].set(w2)
    b2p = jnp.zeros((1, HID_PAD), jnp.float32).at[:, :HID].set(b2)
    w3p = jnp.zeros((HID_PAD, OUT_SLAB), jnp.float32).at[:HID, :OUT_DIM].set(w3)
    b3p = jnp.full((1, OUT_SLAB), NEG_PAD, jnp.float32).at[:, :OUT_DIM].set(b3)
    return (w1p, b1p, w2p, b2p, w3p, b3p)


def reference_forward(x, params):
    w1, b1, w2, b2, w3, b3 = params
    h1 = jnp.maximum(x @ w1 + b1, 0.0)
    h2 = jnp.maximum(h1 @ w2 + b2, 0.0)
    logits = h2 @ w3 + b3
    return jax.nn.softmax(logits, axis=-1)


if __name__ == "__main__":
    key = jax.random.PRNGKey(0)
    k_x, k_x2, k_p = jax.random.split(key, 3)
    params = init_params(k_p)
    kparams = pad_params(params)

    # small batch (single grid step)
    B = 8
    x = jax.random.normal(k_x, (B, IN_DIM), jnp.float32)
    out = jax.block_until_ready(mlp_forward(x, kparams))
    ref = reference_forward(x, params)
    assert out.shape == (B, OUT_DIM)
    assert jnp.allclose(out, ref, atol=1e-5, rtol=1e-5), "mismatch vs reference (B=8)"
    assert jnp.allclose(jnp.sum(out, axis=-1), 1.0, atol=1e-5), "softmax rows must sum to 1"

    # moderate batch (exercises multi-step grid + batch padding path)
    B2 = 200
    x2 = jax.random.normal(k_x2, (B2, IN_DIM), jnp.float32)
    out2 = jax.block_until_ready(mlp_forward(x2, kparams))
    ref2 = reference_forward(x2, params)
    assert out2.shape == (B2, OUT_DIM)
    assert jnp.allclose(out2, ref2, atol=1e-5, rtol=1e-5), "mismatch vs reference (B=200)"
    assert jnp.allclose(jnp.sum(out2, axis=-1), 1.0, atol=1e-5), "softmax rows must sum to 1"

    print("KERNEL_OK")
</pallas_src>

<mosaic_0001>
module attributes {stable_mosaic.version = 11 : i64} {
  func.func @mlp_softmax_kernel(%arg0: i32, %arg1: memref<8x11xf32, #tpu.memory_space<vmem>>, %arg2: memref<11x128xf32, #tpu.memory_space<vmem>>, %arg3: memref<1x128xf32, #tpu.memory_space<vmem>>, %arg4: memref<128x128xf32, #tpu.memory_space<vmem>>, %arg5: memref<1x128xf32, #tpu.memory_space<vmem>>, %arg6: memref<128x8xf32, #tpu.memory_space<vmem>>, %arg7: memref<1x8xf32, #tpu.memory_space<vmem>>, %arg8: memref<8x2xf32, #tpu.memory_space<vmem>>) attributes {dimension_semantics = [#tpu.dimension_semantics<parallel>], iteration_bounds = array<i64: 1>, scalar_prefetch = 0 : i64, scratch_operands = 0 : i64, tpu.core_type = #tpu.core_type<tc>, window_params = [{transform_indices = @transform_0, window_bounds = array<i64: 8, 11>}, {pipeline_mode = #tpu.pipeline_mode<synchronous>, transform_indices = @transform_1, window_bounds = array<i64: 11, 128>}, {pipeline_mode = #tpu.pipeline_mode<synchronous>, transform_indices = @transform_2, window_bounds = array<i64: 1, 128>}, {pipeline_mode = #tpu.pipeline_mode<synchronous>, transform_indices = @transform_3, window_bounds = array<i64: 128, 128>}, {pipeline_mode = #tpu.pipeline_mode<synchronous>, transform_indices = @transform_4, window_bounds = array<i64: 1, 128>}, {pipeline_mode = #tpu.pipeline_mode<synchronous>, transform_indices = @transform_5, window_bounds = array<i64: 128, 8>}, {pipeline_mode = #tpu.pipeline_mode<synchronous>, transform_indices = @transform_6, window_bounds = array<i64: 1, 8>}, {transform_indices = @transform_7, window_bounds = array<i64: 8, 2>}]} {
    %c0 = arith.constant 0 : index
    %c0_0 = arith.constant 0 : index
    %0 = vector.load %arg1[%c0, %c0_0] : memref<8x11xf32, #tpu.memory_space<vmem>>, vector<8x11xf32>
    %c0_1 = arith.constant 0 : index
    %c0_2 = arith.constant 0 : index
    %1 = vector.load %arg2[%c0_1, %c0_2] : memref<11x128xf32, #tpu.memory_space<vmem>>, vector<11x128xf32>
    %cst = arith.constant dense<0.000000e+00> : vector<8x128xf32>
    %2 = tpu.matmul %0, %1, %cst {dimension_numbers = #tpu.dot_dimension_numbers<[1], [0], [0], [1], [0, 0, 1, 1], [], []>} : vector<8x11xf32>, vector<11x128xf32>, vector<8x128xf32> -> vector<8x128xf32>
    %c0_3 = arith.constant 0 : index
    %c0_4 = arith.constant 0 : index
    %3 = vector.load %arg3[%c0_3, %c0_4] : memref<1x128xf32, #tpu.memory_space<vmem>>, vector<1x128xf32>
    %4 = vector.broadcast %3 : vector<1x128xf32> to vector<8x128xf32>
    %5 = arith.addf %2, %4 : vector<8x128xf32>
    %cst_5 = arith.constant 0.000000e+00 : f32
    %6 = vector.broadcast %cst_5 : f32 to vector<8x128xf32>
    %7 = arith.maximumf %5, %6 : vector<8x128xf32>
    %c0_6 = arith.constant 0 : index
    %c0_7 = arith.constant 0 : index
    %8 = vector.load %arg4[%c0_6, %c0_7] : memref<128x128xf32, #tpu.memory_space<vmem>>, vector<128x128xf32>
    %cst_8 = arith.constant dense<0.000000e+00> : vector<8x128xf32>
    %9 = tpu.matmul %7, %8, %cst_8 {dimension_numbers = #tpu.dot_dimension_numbers<[1], [0], [0], [1], [0, 0, 1, 1], [], []>} : vector<8x128xf32>, vector<128x128xf32>, vector<8x128xf32> -> vector<8x128xf32>
    %c0_9 = arith.constant 0 : index
    %c0_10 = arith.constant 0 : index
    %10 = vector.load %arg5[%c0_9, %c0_10] : memref<1x128xf32, #tpu.memory_space<vmem>>, vector<1x128xf32>
    %11 = vector.broadcast %10 : vector<1x128xf32> to vector<8x128xf32>
    %12 = arith.addf %9, %11 : vector<8x128xf32>
    %cst_11 = arith.constant 0.000000e+00 : f32
    %13 = vector.broadcast %cst_11 : f32 to vector<8x128xf32>
    %14 = arith.maximumf %12, %13 : vector<8x128xf32>
    %c0_12 = arith.constant 0 : index
    %c0_13 = arith.constant 0 : index
    %15 = vector.load %arg6[%c0_12, %c0_13] : memref<128x8xf32, #tpu.memory_space<vmem>>, vector<128x8xf32>
    %cst_14 = arith.constant dense<0.000000e+00> : vector<8x8xf32>
    %16 = tpu.matmul %14, %15, %cst_14 {dimension_numbers = #tpu.dot_dimension_numbers<[1], [0], [0], [1], [0, 0, 1, 1], [], []>} : vector<8x128xf32>, vector<128x8xf32>, vector<8x8xf32> -> vector<8x8xf32>
    %c0_15 = arith.constant 0 : index
    %c0_16 = arith.constant 0 : index
    %17 = vector.load %arg7[%c0_15, %c0_16] : memref<1x8xf32, #tpu.memory_space<vmem>>, vector<1x8xf32>
    %18 = vector.broadcast %17 : vector<1x8xf32> to vector<8x8xf32>
    %19 = arith.addf %16, %18 : vector<8x8xf32>
    %cst_17 = arith.constant dense<0xFF800000> : vector<8xf32>
    %20 = vector.multi_reduction <maximumf>, %19, %cst_17 [1] : vector<8x8xf32> to vector<8xf32>
    %21 = vector.shape_cast %20 : vector<8xf32> to vector<8x1xf32>
    %22 = vector.broadcast %21 : vector<8x1xf32> to vector<8x8xf32>
    %23 = arith.subf %19, %22 : vector<8x8xf32>
    %24 = math.exp %23 : vector<8x8xf32>
    %cst_18 = arith.constant dense<0.000000e+00> : vector<8xf32>
    %25 = vector.multi_reduction <add>, %24, %cst_18 [1] : vector<8x8xf32> to vector<8xf32>
    %26 = vector.shape_cast %25 : vector<8xf32> to vector<8x1xf32>
    %27 = tpu.reciprocal %26 : vector<8x1xf32> -> vector<8x1xf32>
    %28 = vector.broadcast %27 : vector<8x1xf32> to vector<8x8xf32>
    %29 = arith.mulf %24, %28 : vector<8x8xf32>
    %30 = vector.extract_strided_slice %29 {offsets = [0, 0], sizes = [8, 2], strides = [1, 1]} : vector<8x8xf32> to vector<8x2xf32>
    %c0_19 = arith.constant 0 : index
    %c0_20 = arith.constant 0 : index
    %31 = vector.load %arg8[%c0_19, %c0_20] : memref<8x2xf32, #tpu.memory_space<vmem>>, vector<8x2xf32>
    tpu.vector_store %arg8[%c0_19, %c0_20], %30 {strides = array<i32>} : memref<8x2xf32, #tpu.memory_space<vmem>>, vector<8x2xf32>,
    return
  }
  func.func @transform_0(%arg0: i32) -> (i32, i32) {
    %c0_i32 = arith.constant 0 : i32
    %c0_i32_0 = arith.constant 0 : i32
    return %arg0, %c0_i32 : i32, i32
  }
  func.func @transform_1(%arg0: i32) -> (i32, i32) {
    %c0_i32 = arith.constant 0 : i32
    %c0_i32_0 = arith.constant 0 : i32
    %c0_i32_1 = arith.constant 0 : i32
    return %c0_i32, %c0_i32_0 : i32, i32
  }
  func.func @transform_2(%arg0: i32) -> (i32, i32) {
    %c0_i32 = arith.constant 0 : i32
    %c0_i32_0 = arith.constant 0 : i32
    %c0_i32_1 = arith.constant 0 : i32
    return %c0_i32, %c0_i32_0 : i32, i32
  }
  func.func @transform_3(%arg0: i32) -> (i32, i32) {
    %c0_i32 = arith.constant 0 : i32
    %c0_i32_0 = arith.constant 0 : i32
    %c0_i32_1 = arith.constant 0 : i32
    return %c0_i32, %c0_i32_0 : i32, i32
  }
  func.func @transform_4(%arg0: i32) -> (i32, i32) {
    %c0_i32 = arith.constant 0 : i32
    %c0_i32_0 = arith.constant 0 : i32
    %c0_i32_1 = arith.constant 0 : i32
    return %c0_i32, %c0_i32_0 : i32, i32
  }
  func.func @transform_5(%arg0: i32) -> (i32, i32) {
    %c0_i32 = arith.constant 0 : i32
    %c0_i32_0 = arith.constant 0 : i32
    %c0_i32_1 = arith.constant 0 : i32
    return %c0_i32, %c0_i32_0 : i32, i32
  }
  func.func @transform_6(%arg0: i32) -> (i32, i32) {
    %c0_i32 = arith.constant 0 : i32
    %c0_i32_0 = arith.constant 0 : i32
    %c0_i32_1 = arith.constant 0 : i32
    return %c0_i32, %c0_i32_0 : i32, i32
  }
  func.func @transform_7(%arg0: i32) -> (i32, i32) {
    %c0_i32 = arith.constant 0 : i32
    %c0_i32_0 = arith.constant 0 : i32
    return %arg0, %c0_i32 : i32, i32
  }
}

</mosaic_0001>

<llo_original>
// kernel: tpu_custom_call.1
$region0: #{tpu_custom_call.1}
  #allocation0 [shape = 'u32[]', space=smem, size = 0x4, offset = 0x4, fixed_abs, tag = 'smem constant byte address 0x4 - core index']
  #allocation1 [shape = 'u32[144,128]{1,0:T(1,128)}', space=vmem, size = 0x12000, scoped, tag = 'internal scratch']
  %s0 = inlined_call_operand.hbm [shape: f32[8,11], index: 0, kind: input, shape index: {}]
  %s1 = inlined_call_operand.vmem [shape: f32[11,128], index: 1, kind: input, shape index: {}]
  %s2 = inlined_call_operand.vmem [shape: f32[1,128], index: 2, kind: input, shape index: {}]
  %s3 = inlined_call_operand.vmem [shape: f32[128,128], index: 3, kind: input, shape index: {}]
  %s4 = inlined_call_operand.vmem [shape: f32[1,128], index: 4, kind: input, shape index: {}]
  %s5 = inlined_call_operand.vmem [shape: f32[128,8], index: 5, kind: input, shape index: {}]
  %s6 = inlined_call_operand.vmem [shape: f32[1,8], index: 6, kind: input, shape index: {}]
  %s7 = inlined_call_operand.vmem [shape: f32[8,2], index: 7, kind: output, shape index: {}]
  %s8 = sld [smem:[#allocation0]]
  $region42: #{tpu_custom_call.1} parent=0
    _
  %s10 = ssub.s32 1, %s8
  %s11 = scalar_select 0, %s10, %s8
  $region1: #{tpu_custom_call.1} parent=0
    #allocation2 [shape = 'u8[4096]{0}', space=vmem, size = 0x1000, scoped, tag = 'input window, operand 0, single buffered']
    #allocation3 [shape = 's32[1]{0}', space=sflag, size = 0x4, scoped, tag = 'scoped memory for tpu_custom_call.1']
    %12 = vsyncpa [#allocation3], 0
    // Predicated region
    $region2: #{tpu_custom_call.1} parent=1 // pred_check
      _
    $region3: #{tpu_custom_call.1} parent=1 // pred_check_branch
      %14 = sbr.rel (0) target = $region5
    $region4: #{tpu_custom_call.1} parent=1 // pred_region
      %s16 = ssub.s32 128, 128
      %17 = vsyncadd [#allocation3], %s16
      %s19 = sshll.u32 [#allocation2], 4
      %s20 = int_to_ptr.vmem [resolvable:$true] %s19
      %22 = dma.hbm_to_vmem [thread:$0]  %s0, 128, %s20, [#allocation3]
    $region5: #{tpu_custom_call.1} parent=1 // pred_fallthru
      _
    // Predicated region
    $region6: #{tpu_custom_call.1} parent=1 // pred_check
      _
    $region7: #{tpu_custom_call.1} parent=1 // pred_check_branch
      %24 = sbr.rel (0) target = $region9
    $region8: #{tpu_custom_call.1} parent=1 // pred_region
      _
    $region9: #{tpu_custom_call.1} parent=1 // pred_fallthru
      _
    // Predicated region
    $region10: #{tpu_custom_call.1} parent=1 // pred_check
      _
    $region11: #{tpu_custom_call.1} parent=1 // pred_check_branch
      %26 = sbr.rel (0) target = $region13
    $region12: #{tpu_custom_call.1} parent=1 // pred_region
      _
    $region13: #{tpu_custom_call.1} parent=1 // pred_fallthru
      _
    // Predicated region
    $region14: #{tpu_custom_call.1} parent=1 // pred_check
      _
    $region15: #{tpu_custom_call.1} parent=1 // pred_check_branch
      %28 = sbr.rel (0) target = $region17
    $region16: #{tpu_custom_call.1} parent=1 // pred_region
      _
    $region17: #{tpu_custom_call.1} parent=1 // pred_fallthru
      _
    // Predicated region
    $region18: #{tpu_custom_call.1} parent=1 // pred_check
      _
    $region19: #{tpu_custom_call.1} parent=1 // pred_check_branch
      %30 = sbr.rel (0) target = $region21
    $region20: #{tpu_custom_call.1} parent=1 // pred_region
      _
    $region21: #{tpu_custom_call.1} parent=1 // pred_fallthru
      _
    // Predicated region
    $region22: #{tpu_custom_call.1} parent=1 // pred_check
      _
    $region23: #{tpu_custom_call.1} parent=1 // pred_check_branch
      %32 = sbr.rel (0) target = $region25
    $region24: #{tpu_custom_call.1} parent=1 // pred_region
      _
    $region25: #{tpu_custom_call.1} parent=1 // pred_fallthru
      _
    // Predicated region
    $region26: #{tpu_custom_call.1} parent=1 // pred_check
      _
    $region27: #{tpu_custom_call.1} parent=1 // pred_check_branch
      %34 = sbr.rel (0) target = $region29
    $region28: #{tpu_custom_call.1} parent=1 // pred_region
      _
    $region29: #{tpu_custom_call.1} parent=1 // pred_fallthru
      _
    // Predicated region
    $region30: #{tpu_custom_call.1} parent=1 // pred_check
      _
    $region31: #{tpu_custom_call.1} parent=1 // pred_check_branch
      %36 = sbr.rel (0) target = $region33
    $region32: #{tpu_custom_call.1} parent=1 // pred_region
      %37 = dma.done [#allocation3], 128
    $region33: #{tpu_custom_call.1} parent=1 // pred_fallthru
      _
    %v38 = vld [vmem:[#allocation2] sm:$0xff]
    %v39 = vld [vmem:[%s1] sm:$0xff]
    %v40 = vld [vmem:[%s1 + $0x8] sm:$0x7]
    %v41 = vld [vmem:[%s2] sm:$0x1]
    %v43 = vlaneseq
    %v44 = vshrl.u32 %v43, 7
    %v45 = vsub.s32 0, %v44
    %v46 = vrot.slane %v41, %v45
    %vm48 = vcmask 89088
    %v50 = vsel %vm48, %v38, 0
    %vm52 = vcmask 1042432
    %v54 = vsel %vm52, %v40, 0
    %56 = vmatprep.subr.mxu0 0.0
    %57 = vmatpush1.msra.mxu0 %v39
    %58 = vmatprep.subr.mxu0 0.0
    %59 = vmatpush1.msra.mxu0 %v54
    %60 = vmatprep.subr.mxu0 0.0
    %61 = vmatpush1.msra.mxu0 0.0
    %62 = vmatprep.subr.mxu0 0.0
    %63 = vmatpush1.msra.mxu0 0.0
    %64 = vmatprep.subr.mxu0 0.0
    %65 = vmatpush1.msra.mxu0 0.0
    %66 = vmatprep.subr.mxu0 0.0
    %67 = vmatpush1.msra.mxu0 0.0
    %68 = vmatprep.subr.mxu0 0.0
    %69 = vmatpush1.msra.mxu0 0.0
    %70 = vmatprep.subr.mxu0 0.0
    %71 = vmatpush1.msra.mxu0 0.0
    %72 = vmatprep.subr.mxu0 0.0
    %73 = vmatpush1.msra.mxu0 0.0
    %74 = vmatprep.subr.mxu0 0.0
    %75 = vmatpush1.msra.mxu0 0.0
    %76 = vmatprep.subr.mxu0 0.0
    %77 = vmatpush1.msra.mxu0 0.0
    %78 = vmatprep.subr.mxu0 0.0
    %79 = vmatpush1.msra.mxu0 0.0
    %80 = vmatprep.subr.mxu0 0.0
    %81 = vmatpush1.msra.mxu0 0.0
    %82 = vmatprep.subr.mxu0 0.0
    %83 = vmatpush1.msra.mxu0 0.0
    %84 = vmatprep.subr.mxu0 0.0
    %85 = vmatpush1.msra.mxu0 0.0
    %86 = vmatprep.subr.mxu0 0.0
    %87 = vmatpush1.msra.mxu0 0.0
    %88 = vmatprep.subr.mxu0 0.0
    %89 = vmatpush1.msra.mxu0 0.0
    %90 = vmatprep.subr.mxu0 0.0
    %91 = vmatpush1.msra.mxu0 0.0
    %92 = vmatprep.subr.mxu0 0.0
    %93 = vmatpush1.msra.mxu0 0.0
    %94 = vmatprep.subr.mxu0 0.0
    %95 = vmatpush1.msra.mxu0 0.0
    %96 = vmatprep.subr.mxu0 0.0
    %97 = vmatpush1.msra.mxu0 0.0
    %98 = vmatprep.subr.mxu0 0.0
    %99 = vmatpush1.msra.mxu0 0.0
    %100 = vmatprep.subr.mxu0 0.0
    %101 = vmatpush1.msra.mxu0 0.0
    %102 = vmatprep.subr.mxu0 0.0
    %103 = vmatpush1.msra.mxu0 0.0
    %104 = vmatprep.subr.mxu0 0.0
    %105 = vmatpush1.msra.mxu0 0.0
    %106 = vmatprep.subr.mxu0 0.0
    %107 = vmatpush1.msra.mxu0 0.0
    %108 = vmatprep.subr.mxu0 0.0
    %109 = vmatpush1.msra.mxu0 0.0
    %110 = vmatprep.subr.mxu0 0.0
    %111 = vmatpush1.msra.mxu0 0.0
    %112 = vmatprep.subr.mxu0 0.0
    %113 = vmatpush1.msra.mxu0 0.0
    %114 = vmatprep.subr.mxu0 0.0
    %115 = vmatpush1.msra.mxu0 0.0
    %116 = vmatprep.subr.mxu0 0.0
    %117 = vmatpush1.msra.mxu0 0.0
    %118 = vmatprep.subr.mxu0 0.0
    %119 = vmatpush1.msra.mxu0 0.0
    %120 = vmatprep.mubr.f32.mxu0 0.0
    %121 = vmatmul.mubr.f32.gmra.mrb[0].mxu0 %v50
    %v122 = vpop.f32.mrb[0].mxu0
    %v123 = vadd.f32 %v46, %v122
    %v124 = vpop.f32.mrb[0].mxu0
    %125 = vdwg.mxu0
    %v126 = vmax.f32 %v123, 0.0
    %v127 = vld [vmem:[%s3] sm:$0xff]
    %v128 = vld [vmem:[%s3 + $0x8] sm:$0xff]
    %v129 = vld [vmem:[%s3 + $0x10] sm:$0xff]
    %v130 = vld [vmem:[%s3 + $0x18] sm:$0xff]
    %v131 = vld [vmem:[%s3 + $0x20] sm:$0xff]
    %v132 = vld [vmem:[%s3 + $0x28] sm:$0xff]
    %v133 = vld [vmem:[%s3 + $0x30] sm:$0xff]
    %v134 = vld [vmem:[%s3 + $0x38] sm:$0xff]
    %v135 = vld [vmem:[%s3 + $0x40] sm:$0xff]
    %v136 = vld [vmem:[%s3 + $0x48] sm:$0xff]
    %v137 = vld [vmem:[%s3 + $0x50] sm:$0xff]
    %v138 = vld [vmem:[%s3 + $0x58] sm:$0xff]
    %v139 = vld [vmem:[%s3 + $0x60] sm:$0xff]
    %v140 = vld [vmem:[%s3 + $0x68] sm:$0xff]
    %v141 = vld [vmem:[%s3 + $0x70] sm:$0xff]
    %v142 = vld [vmem:[%s3 + $0x78] sm:$0xff]
    %v143 = vld [vmem:[%s4] sm:$0x1]
    %v145 = vlaneseq
    %v146 = vshrl.u32 %v145, 7
    %v147 = vsub.s32 0, %v146
    %v148 = vrot.slane %v143, %v147
    %150 = vmatprep.subr.mxu0 0.0
    %151 = vmatpush1.msra.mxu0 %v127
    %152 = vmatprep.subr.mxu0 0.0
    %153 = vmatpush1.msra.mxu0 %v128
    %154 = vmatprep.subr.mxu0 0.0
    %155 = vmatpush1.msra.mxu0 %v129
    %156 = vmatprep.subr.mxu0 0.0
    %157 = vmatpush1.msra.mxu0 %v130
    %158 = vmatprep.subr.mxu0 0.0
    %159 = vmatpush1.msra.mxu0 %v131
    %160 = vmatprep.subr.mxu0 0.0
    %161 = vmatpush1.msra.mxu0 %v132
    %162 = vmatprep.subr.mxu0 0.0
    %163 = vmatpush1.msra.mxu0 %v133
    %164 = vmatprep.subr.mxu0 0.0
    %165 = vmatpush1.msra.mxu0 %v134
    %166 = vmatprep.subr.mxu0 0.0
    %167 = vmatpush1.msra.mxu0 %v135
    %168 = vmatprep.subr.mxu0 0.0
    %169 = vmatpush1.msra.mxu0 %v136
    %170 = vmatprep.subr.mxu0 0.0
    %171 = vmatpush1.msra.mxu0 %v137
    %172 = vmatprep.subr.mxu0 0.0
    %173 = vmatpush1.msra.mxu0 %v138
    %174 = vmatprep.subr.mxu0 0.0
    %175 = vmatpush1.msra.mxu0 %v139
    %176 = vmatprep.subr.mxu0 0.0
    %177 = vmatpush1.msra.mxu0 %v140
    %178 = vmatprep.subr.mxu0 0.0
    %179 = vmatpush1.msra.mxu0 %v141
    %180 = vmatprep.subr.mxu0 0.0
    %181 = vmatpush1.msra.mxu0 %v142
    %182 = vmatprep.subr.mxu0 0.0
    %183 = vmatpush1.msra.mxu0 0.0
    %184 = vmatprep.subr.mxu0 0.0
    %185 = vmatpush1.msra.mxu0 0.0
    %186 = vmatprep.subr.mxu0 0.0
    %187 = vmatpush1.msra.mxu0 0.0
    %188 = vmatprep.subr.mxu0 0.0
    %189 = vmatpush1.msra.mxu0 0.0
    %190 = vmatprep.subr.mxu0 0.0
    %191 = vmatpush1.msra.mxu0 0.0
    %192 = vmatprep.subr.mxu0 0.0
    %193 = vmatpush1.msra.mxu0 0.0
    %194 = vmatprep.subr.mxu0 0.0
    %195 = vmatpush1.msra.mxu0 0.0
    %196 = vmatprep.subr.mxu0 0.0
    %197 = vmatpush1.msra.mxu0 0.0
    %198 = vmatprep.subr.mxu0 0.0
    %199 = vmatpush1.msra.mxu0 0.0
    %200 = vmatprep.subr.mxu0 0.0
    %201 = vmatpush1.msra.mxu0 0.0
    %202 = vmatprep.subr.mxu0 0.0
    %203 = vmatpush1.msra.mxu0 0.0
    %204 = vmatprep.subr.mxu0 0.0
    %205 = vmatpush1.msra.mxu0 0.0
    %206 = vmatprep.subr.mxu0 0.0
    %207 = vmatpush1.msra.mxu0 0.0
    %208 = vmatprep.subr.mxu0 0.0
    %209 = vmatpush1.msra.mxu0 0.0
    %210 = vmatprep.subr.mxu0 0.0
    %211 = vmatpush1.msra.mxu0 0.0
    %212 = vmatprep.subr.mxu0 0.0
    %213 = vmatpush1.msra.mxu0 0.0
    %214 = vmatprep.mubr.f32.mxu0 0.0
    %215 = vmatmul.mubr.f32.gmra.mrb[0].mxu0 %v126
    %v216 = vpop.f32.mrb[0].mxu0
    %v217 = vadd.f32 %v148, %v216
    %v218 = vpop.f32.mrb[0].mxu0
    %219 = vdwg.mxu0
    %v220 = vmax.f32 %v217, 0.0
    %v221 = vld [vmem:[%s5] sm:$0xff]
    %v222 = vld [vmem:[%s5 + $0x8] sm:$0xff]
    %v223 = vld [vmem:[%s5 + $0x10] sm:$0xff]
    %v224 = vld [vmem:[%s5 + $0x18] sm:$0xff]
    %v225 = vld [vmem:[%s5 + $0x20] sm:$0xff]
    %v226 = vld [vmem:[%s5 + $0x28] sm:$0xff]
    %v227 = vld [vmem:[%s5 + $0x30] sm:$0xff]
    %v228 = vld [vmem:[%s5 + $0x38] sm:$0xff]
    %v229 = vld [vmem:[%s5 + $0x40] sm:$0xff]
    %v230 = vld [vmem:[%s5 + $0x48] sm:$0xff]
    %v231 = vld [vmem:[%s5 + $0x50] sm:$0xff]
    %v232 = vld [vmem:[%s5 + $0x58] sm:$0xff]
    %v233 = vld [vmem:[%s5 + $0x60] sm:$0xff]
    %v234 = vld [vmem:[%s5 + $0x68] sm:$0xff]
    %v235 = vld [vmem:[%s5 + $0x70] sm:$0xff]
    %v236 = vld [vmem:[%s5 + $0x78] sm:$0xff]
    %v237 = vld [vmem:[%s6] sm:$0x1]
    %v239 = vlaneseq
    %v240 = vshrl.u32 %v239, 7
    %v241 = vsub.s32 0, %v240
    %v242 = vrot.slane %v237, %v241
    %244 = vmatprep.subr.mxu0 0.0
    %245 = vmatpush1.msra.mxu0 %v221
    %246 = vmatprep.subr.mxu0 0.0
    %247 = vmatpush1.msra.mxu0 %v222
    %248 = vmatprep.subr.mxu0 0.0
    %249 = vmatpush1.msra.mxu0 %v223
    %250 = vmatprep.subr.mxu0 0.0
    %251 = vmatpush1.msra.mxu0 %v224
    %252 = vmatprep.subr.mxu0 0.0
    %253 = vmatpush1.msra.mxu0 %v225
    %254 = vmatprep.subr.mxu0 0.0
    %255 = vmatpush1.msra.mxu0 %v226
    %256 = vmatprep.subr.mxu0 0.0
    %257 = vmatpush1.msra.mxu0 %v227
    %258 = vmatprep.subr.mxu0 0.0
    %259 = vmatpush1.msra.mxu0 %v228
    %260 = vmatprep.subr.mxu0 0.0
    %261 = vmatpush1.msra.mxu0 %v229
    %262 = vmatprep.subr.mxu0 0.0
    %263 = vmatpush1.msra.mxu0 %v230
    %264 = vmatprep.subr.mxu0 0.0
    %265 = vmatpush1.msra.mxu0 %v231
    %266 = vmatprep.subr.mxu0 0.0
    %267 = vmatpush1.msra.mxu0 %v232
    %268 = vmatprep.subr.mxu0 0.0
    %269 = vmatpush1.msra.mxu0 %v233
    %270 = vmatprep.subr.mxu0 0.0
    %271 = vmatpush1.msra.mxu0 %v234
    %272 = vmatprep.subr.mxu0 0.0
    %273 = vmatpush1.msra.mxu0 %v235
    %274 = vmatprep.subr.mxu0 0.0
    %275 = vmatpush1.msra.mxu0 %v236
    %276 = vmatprep.subr.mxu0 0.0
    %277 = vmatpush1.msra.mxu0 0.0
    %278 = vmatprep.subr.mxu0 0.0
    %279 = vmatpush1.msra.mxu0 0.0
    %280 = vmatprep.subr.mxu0 0.0
    %281 = vmatpush1.msra.mxu0 0.0
    %282 = vmatprep.subr.mxu0 0.0
    %283 = vmatpush1.msra.mxu0 0.0
    %284 = vmatprep.subr.mxu0 0.0
    %285 = vmatpush1.msra.mxu0 0.0
    %286 = vmatprep.subr.mxu0 0.0
    %287 = vmatpush1.msra.mxu0 0.0
    %288 = vmatprep.subr.mxu0 0.0
    %289 = vmatpush1.msra.mxu0 0.0
    %290 = vmatprep.subr.mxu0 0.0
    %291 = vmatpush1.msra.mxu0 0.0
    %292 = vmatprep.subr.mxu0 0.0
    %293 = vmatpush1.msra.mxu0 0.0
    %294 = vmatprep.subr.mxu0 0.0
    %295 = vmatpush1.msra.mxu0 0.0
    %296 = vmatprep.subr.mxu0 0.0
    %297 = vmatpush1.msra.mxu0 0.0
    %298 = vmatprep.subr.mxu0 0.0
    %299 = vmatpush1.msra.mxu0 0.0
    %300 = vmatprep.subr.mxu0 0.0
    %301 = vmatpush1.msra.mxu0 0.0
    %302 = vmatprep.subr.mxu0 0.0
    %303 = vmatpush1.msra.mxu0 0.0
    %304 = vmatprep.subr.mxu0 0.0
    %305 = vmatpush1.msra.mxu0 0.0
    %306 = vmatprep.subr.mxu0 0.0
    %307 = vmatpush1.msra.mxu0 0.0
    %308 = vmatprep.mubr.f32.mxu0 0.0
    %309 = vmatmul.mubr.f32.gmra.mrb[0].mxu0 %v220
    %v310 = vpop.f32.mrb[0].mxu0
    %v311 = vadd.f32 %v242, %v310
    %v312 = vpop.f32.mrb[0].mxu0
    %313 = vdwg.mxu0
    %vm314 = vcmask 64512
    %v315 = vsel %vm314, %v311, -inf
    %316 = vmax.xlane.f32.xlu0 %v315
    %v317 = vpop.xlane.xlu0 %316
    %v318 = vsub.f32 %v311, %v317
    %v319 = vmul.f32 %v318, 1.442695
    %v320 = vpow.pop %v319
    %v321 = vsel %vm314, %v320, 0.0
    %322 = vadd.xlane.f32.xlu0 %v321
    %v323 = vpop.xlane.xlu0 %322
    %v324 = vrcp.pop %v323
    %v325 = vmul.f32 %v320, %v324
    %vm326 = vcmask 15360
    %327 = vst.msk [vmem:[%s7] sm:$0xff] %vm326, %v325
    // Predicated region
    $region34: #{tpu_custom_call.1} parent=1 // pred_check
      _
    $region35: #{tpu_custom_call.1} parent=1 // pred_check_branch
      %329 = sbr.rel (0) target = $region37
    $region36: #{tpu_custom_call.1} parent=1 // pred_region
      _
    $region37: #{tpu_custom_call.1} parent=1 // pred_fallthru
      _
    // Predicated region
    $region38: #{tpu_custom_call.1} parent=1 // pred_check
      _
    $region39: #{tpu_custom_call.1} parent=1 // pred_check_branch
      %331 = sbr.rel (0) target = $region41
    $region40: #{tpu_custom_call.1} parent=1 // pred_region
      _
    $region41: #{tpu_custom_call.1} parent=1 // pred_fallthru
      _
    %332 = vsyncpa [#allocation3], 1

</llo_original>
